<compile_context>
chip_gen: v5e
topology: v5e:2x2
jax: 0.10.0
libtpu: 0.0.40
codegen_flags: <defaults>
</compile_context>

<pallas_src>
from functools import partial

import jax
import jax.numpy as jnp
from jax.experimental import pallas as pl
from jax.experimental.pallas import tpu as pltpu


# ----------------------------------------------------------------------------
# Fused kernel: inner model (both CFG halves, algebraically merged) + CFG
# blend.  Grid = (batch, spatial tile).
# ----------------------------------------------------------------------------
def _cfg_denoiser_kernel(sigma_ref, cs_ref, wm_ref, x_ref, u_ref, c_ref,
                         wct_ref, o_ref, bias_ref):
    # sigma_ref : (B,)                 f32 SMEM
    # cs_ref    : (1,)                 f32 SMEM   (cond_scale)
    # wm_ref    : (C, C)               f32 SMEM   (channel-mix weights)
    # x_ref     : (C, rows, 128)       VMEM       (this batch elem / HW tile)
    # u_ref     : (T, D)               VMEM       (uncond tokens, this batch)
    # c_ref     : (T, D)               VMEM       (cond tokens, this batch)
    # wct_ref   : (C, D)               f32 VMEM   (Wc transposed)
    # o_ref     : (C, rows, 128)       VMEM       (blended output tile)
    # bias_ref  : (C, 1)               f32 VMEM scratch (per-batch blended bias)
    b = pl.program_id(0)
    t = pl.program_id(1)

    sig = sigma_ref[b]
    scale = 1.0 / (sig * sig + 1.0)

    # Per-batch conditioning bias (HW-independent): compute once, on the first
    # spatial tile of each batch element, blended with cond_scale up front.
    @pl.when(t == 0)
    def _():
        cs = cs_ref[0]
        wc_t = wct_ref[...].astype(jnp.float32)                          # (C, D)
        mean_u = jnp.mean(u_ref[...].astype(jnp.float32), axis=0, keepdims=True)
        mean_c = jnp.mean(c_ref[...].astype(jnp.float32), axis=0, keepdims=True)
        bias_u = jnp.sum(wc_t * mean_u, axis=1, keepdims=True)           # (C, 1)
        bias_c = jnp.sum(wc_t * mean_c, axis=1, keepdims=True)           # (C, 1)
        bias_ref[...] = bias_u + (bias_c - bias_u) * cs

    C = wm_ref.shape[0]
    # Channel mix on the VPU: unrolled scalar*vector FMAs with the sigma scale
    # folded into the SMEM weight scalars.  Every load / store touches one
    # full (rows, 128) channel plane -> dense, aligned vector accesses; both
    # eps halves never exist (merged into the pre-blended bias).
    for o in range(C):
        acc = x_ref[0].astype(jnp.float32) * (wm_ref[o, 0] * scale)
        for ci in range(1, C):
            acc = acc + x_ref[ci].astype(jnp.float32) * (wm_ref[o, ci] * scale)
        o_ref[o] = (acc + bias_ref[o:o + 1, :]).astype(o_ref.dtype)


# ----------------------------------------------------------------------------
# CFGDenoiser.forward
# ----------------------------------------------------------------------------
@partial(jax.jit, static_argnames=("rows_per_tile",))
def cfg_denoiser_forward(x, sigma, uncond, cond, cond_scale, wm, wc,
                         rows_per_tile=512):
    B, C, H, W = x.shape
    HW = H * W
    T, D = uncond.shape[1], uncond.shape[2]
    LANES = 128
    assert rows_per_tile % 8 == 0, "spatial tile rows must be (8,128)-aligned"

    # Lane-dense spatial layout: pad HW up to a multiple of 128 (padded region
    # is zero-filled and sliced off after the kernel).
    hw_rows = -(-HW // LANES)
    if hw_rows <= rows_per_tile:
        rows_tile = hw_rows                     # full-extent block (always legal)
        hw_rows_pad = hw_rows
    else:
        rows_tile = rows_per_tile               # multiple of 8 -> aligned tiles
        hw_rows_pad = -(-hw_rows // rows_tile) * rows_tile
    n_tiles = hw_rows_pad // rows_tile
    HW_pad = hw_rows_pad * LANES

    x_flat = x.reshape(B, C, HW)
    if HW_pad != HW:
        x_flat = jnp.pad(x_flat, ((0, 0), (0, 0), (0, HW_pad - HW)))
    x_r = x_flat.reshape(B, C, hw_rows_pad, LANES)

    sigma_f = sigma.astype(jnp.float32)
    cs = jnp.asarray(cond_scale, dtype=jnp.float32).reshape((1,))
    wm_f = wm.astype(jnp.float32)
    wc_t = jnp.transpose(wc).astype(jnp.float32)                        # (C, D)

    out = pl.pallas_call(
        _cfg_denoiser_kernel,
        out_shape=jax.ShapeDtypeStruct((B, C, hw_rows_pad, LANES), x.dtype),
        grid=(B, n_tiles),
        in_specs=[
            pl.BlockSpec(memory_space=pltpu.MemorySpace.SMEM),           # sigma
            pl.BlockSpec(memory_space=pltpu.MemorySpace.SMEM),           # cond_scale
            pl.BlockSpec(memory_space=pltpu.MemorySpace.SMEM),           # Wm
            pl.BlockSpec((None, C, rows_tile, LANES),
                         lambda b, t: (b, 0, t, 0)),                     # x tile
            pl.BlockSpec((None, T, D), lambda b, t: (b, 0, 0)),          # uncond
            pl.BlockSpec((None, T, D), lambda b, t: (b, 0, 0)),          # cond
            pl.BlockSpec((C, D), lambda b, t: (0, 0)),                   # Wc^T
        ],
        out_specs=pl.BlockSpec((None, C, rows_tile, LANES),
                               lambda b, t: (b, 0, t, 0)),
        scratch_shapes=[pltpu.VMEM((C, 1), jnp.float32)],                # bias
        compiler_params=pltpu.CompilerParams(
            # Batch axis "parallel" (both v7x TensorCores get work); the
            # spatial-tile axis must stay "arbitrary" so the per-batch bias
            # computed at tile 0 is seen by later tiles on the same core.
            dimension_semantics=("parallel", "arbitrary")),
    )(sigma_f, cs, wm_f, x_r, uncond, cond, wc_t)

    out = out.reshape(B, C, HW_pad)[:, :, :HW]
    return out.reshape(B, C, H, W)


# ----------------------------------------------------------------------------
# Pure-JAX reference (correctness sanity check)
# ----------------------------------------------------------------------------
def _inner_model_ref(x_in, sigma_in, cond_in, wm, wc):
    c_out = 1.0 / (sigma_in ** 2 + 1.0)                                 # (2B,)
    h = jnp.einsum("oc,bchw->bohw", wm, x_in,
                   precision=jax.lax.Precision.HIGHEST)
    bias = jnp.einsum("bd,dc->bc", jnp.mean(cond_in, axis=1), wc,
                      precision=jax.lax.Precision.HIGHEST)              # (2B, C)
    return h * c_out[:, None, None, None] + bias[:, :, None, None]


def _cfg_ref(x, sigma, uncond, cond, cond_scale, wm, wc):
    B = x.shape[0]
    x_in = jnp.concatenate([x, x], axis=0)
    sigma_in = jnp.concatenate([sigma, sigma], axis=0)
    cond_in = jnp.concatenate([uncond, cond], axis=0)
    out = _inner_model_ref(x_in, sigma_in, cond_in, wm, wc)
    u, c = out[:B], out[B:]
    return u + (c - u) * cond_scale


if __name__ == "__main__":
    key = jax.random.PRNGKey(0)
    kx, ks, ku, kc, kw1, kw2 = jax.random.split(key, 6)

    B, C, T, D = 2, 4, 8, 32
    cond_scale = 7.5

    # deterministic synthetic inner-model weights
    wm = (jax.random.normal(kw1, (C, C), dtype=jnp.float32) * 0.3
          + jnp.eye(C, dtype=jnp.float32))
    wc = jax.random.normal(kw2, (D, C), dtype=jnp.float32) * 0.1
    uncond = jax.random.normal(ku, (B, T, D), dtype=jnp.float32)
    cond = jax.random.normal(kc, (B, T, D), dtype=jnp.float32)
    sigma = jax.random.uniform(ks, (B,), dtype=jnp.float32,
                               minval=0.1, maxval=2.0)

    # Primary toy case (single spatial tile per batch element).
    H = W = 16
    x = jax.random.normal(kx, (B, C, H, W), dtype=jnp.float32)
    out = cfg_denoiser_forward(x, sigma, uncond, cond, cond_scale, wm, wc)
    out = jax.block_until_ready(out)
    ref = _cfg_ref(x, sigma, uncond, cond, cond_scale, wm, wc)
    assert out.shape == (B, C, H, W)
    assert jnp.max(jnp.abs(out - ref)) < 1e-4, "mismatch vs pure-JAX reference"

    # Secondary case: exercises HW padding (50*50 -> 24*128) plus the
    # multi-tile grid and the pl.when bias-hoist / scratch-reuse path.
    H2 = W2 = 50
    x2 = jax.random.normal(kx, (B, C, H2, W2), dtype=jnp.float32)
    out2 = cfg_denoiser_forward(x2, sigma, uncond, cond, cond_scale, wm, wc,
                                rows_per_tile=8)
    out2 = jax.block_until_ready(out2)
    ref2 = _cfg_ref(x2, sigma, uncond, cond, cond_scale, wm, wc)
    assert out2.shape == (B, C, H2, W2)
    assert jnp.max(jnp.abs(out2 - ref2)) < 1e-4, "mismatch (tiled/padded case)"

    print("KERNEL_OK")
</pallas_src>

<mosaic_0001>
module attributes {stable_mosaic.version = 11 : i64} {
  func.func @_cfg_denoiser_kernel(%arg0: i32, %arg1: i32, %arg2: memref<2xf32, #tpu.memory_space<smem>>, %arg3: memref<1xf32, #tpu.memory_space<smem>>, %arg4: memref<4x4xf32, #tpu.memory_space<smem>>, %arg5: memref<1x4x2x128xf32, #tpu.memory_space<vmem>>, %arg6: memref<1x8x32xf32, #tpu.memory_space<vmem>>, %arg7: memref<1x8x32xf32, #tpu.memory_space<vmem>>, %arg8: memref<4x32xf32, #tpu.memory_space<vmem>>, %arg9: memref<1x4x2x128xf32, #tpu.memory_space<vmem>>, %arg10: memref<4x1xf32, #tpu.memory_space<vmem>>) attributes {dimension_semantics = [#tpu.dimension_semantics<parallel>, #tpu.dimension_semantics<arbitrary>], iteration_bounds = array<i64: 2, 1>, scalar_prefetch = 0 : i64, scratch_operands = 1 : i64, tpu.core_type = #tpu.core_type<tc>, window_params = [{transform_indices = @transform_0, window_bounds = array<i64: 2>}, {transform_indices = @transform_1, window_bounds = array<i64: 1>}, {transform_indices = @transform_2, window_bounds = array<i64: 4, 4>}, {transform_indices = @transform_3, window_bounds = array<i64: 1, 4, 2, 128>}, {transform_indices = @transform_4, window_bounds = array<i64: 1, 8, 32>}, {transform_indices = @transform_5, window_bounds = array<i64: 1, 8, 32>}, {pipeline_mode = #tpu.pipeline_mode<synchronous>, transform_indices = @transform_6, window_bounds = array<i64: 4, 32>}, {transform_indices = @transform_7, window_bounds = array<i64: 1, 4, 2, 128>}]} {
    %0 = arith.index_cast %arg0 : i32 to index
    %1 = memref.load %arg2[%0] : memref<2xf32, #tpu.memory_space<smem>>
    %2 = arith.mulf %1, %1 : f32
    %cst = arith.constant 1.000000e+00 : f32
    %3 = arith.addf %2, %cst : f32
    %cst_0 = arith.constant 1.000000e+00 : f32
    %4 = arith.divf %cst_0, %3 : f32
    %c0_i32 = arith.constant 0 : i32
    %5 = arith.cmpi eq, %arg1, %c0_i32 : i32
    %6 = arith.extui %5 : i1 to i32
    %c0_i32_1 = arith.constant 0 : i32
    %7 = arith.cmpi ne, %6, %c0_i32_1 : i32
    scf.if %7 {
      %c0_118 = arith.constant 0 : index
      %140 = memref.load %arg3[%c0_118] : memref<1xf32, #tpu.memory_space<smem>>
      %c0_119 = arith.constant 0 : index
      %c0_120 = arith.constant 0 : index
      %141 = vector.load %arg8[%c0_119, %c0_120] : memref<4x32xf32, #tpu.memory_space<vmem>>, vector<4x32xf32>
      %c0_121 = arith.constant 0 : index
      %c0_122 = arith.constant 0 : index
      %c0_123 = arith.constant 0 : index
      %142 = vector.load %arg6[%c0_121, %c0_122, %c0_123] : memref<1x8x32xf32, #tpu.memory_space<vmem>>, vector<1x8x32xf32>
      %143 = vector.shape_cast %142 : vector<1x8x32xf32> to vector<8x32xf32>
      %cst_124 = arith.constant dense<0.000000e+00> : vector<32xf32>
      %144 = vector.multi_reduction <add>, %143, %cst_124 [0] : vector<8x32xf32> to vector<32xf32>
      %145 = vector.shape_cast %144 : vector<32xf32> to vector<1x32xf32>
      %cst_125 = arith.constant 8.000000e+00 : f32
      %146 = vector.broadcast %cst_125 : f32 to vector<1x32xf32>
      %147 = arith.divf %145, %146 : vector<1x32xf32>
      %c0_126 = arith.constant 0 : index
      %c0_127 = arith.constant 0 : index
      %c0_128 = arith.constant 0 : index
      %148 = vector.load %arg7[%c0_126, %c0_127, %c0_128] : memref<1x8x32xf32, #tpu.memory_space<vmem>>, vector<1x8x32xf32>
      %149 = vector.shape_cast %148 : vector<1x8x32xf32> to vector<8x32xf32>
      %cst_129 = arith.constant dense<0.000000e+00> : vector<32xf32>
      %150 = vector.multi_reduction <add>, %149, %cst_129 [0] : vector<8x32xf32> to vector<32xf32>
      %151 = vector.shape_cast %150 : vector<32xf32> to vector<1x32xf32>
      %cst_130 = arith.constant 8.000000e+00 : f32
      %152 = vector.broadcast %cst_130 : f32 to vector<1x32xf32>
      %153 = arith.divf %151, %152 : vector<1x32xf32>
      %154 = vector.broadcast %147 : vector<1x32xf32> to vector<4x32xf32>
      %155 = arith.mulf %141, %154 : vector<4x32xf32>
      %cst_131 = arith.constant dense<0.000000e+00> : vector<4xf32>
      %156 = vector.multi_reduction <add>, %155, %cst_131 [1] : vector<4x32xf32> to vector<4xf32>
      %157 = vector.shape_cast %156 : vector<4xf32> to vector<4x1xf32>
      %158 = vector.broadcast %153 : vector<1x32xf32> to vector<4x32xf32>
      %159 = arith.mulf %141, %158 : vector<4x32xf32>
      %cst_132 = arith.constant dense<0.000000e+00> : vector<4xf32>
      %160 = vector.multi_reduction <add>, %159, %cst_132 [1] : vector<4x32xf32> to vector<4xf32>
      %161 = vector.shape_cast %160 : vector<4xf32> to vector<4x1xf32>
      %162 = arith.subf %161, %157 : vector<4x1xf32>
      %163 = vector.broadcast %140 : f32 to vector<4x1xf32>
      %164 = arith.mulf %162, %163 : vector<4x1xf32>
      %165 = arith.addf %157, %164 : vector<4x1xf32>
      %c0_133 = arith.constant 0 : index
      %c0_134 = arith.constant 0 : index
      %166 = vector.load %arg10[%c0_133, %c0_134] : memref<4x1xf32, #tpu.memory_space<vmem>>, vector<4x1xf32>
      tpu.vector_store %arg10[%c0_133, %c0_134], %165 {strides = array<i32>} : memref<4x1xf32, #tpu.memory_space<vmem>>, vector<4x1xf32>,
    } else {
    }
    %c0 = arith.constant 0 : index
    %c0_2 = arith.constant 0 : index
    %c0_3 = arith.constant 0 : index
    %c0_4 = arith.constant 0 : index
    %8 = vector.load %arg5[%c0, %c0_2, %c0_3, %c0_4] : memref<1x4x2x128xf32, #tpu.memory_space<vmem>>, vector<1x1x2x128xf32>
    %9 = vector.shape_cast %8 : vector<1x1x2x128xf32> to vector<2x128xf32>
    %c0_5 = arith.constant 0 : index
    %c0_6 = arith.constant 0 : index
    %10 = memref.load %arg4[%c0_5, %c0_6] : memref<4x4xf32, #tpu.memory_space<smem>>
    %11 = arith.mulf %10, %4 : f32
    %12 = vector.broadcast %11 : f32 to vector<2x128xf32>
    %13 = arith.mulf %9, %12 : vector<2x128xf32>
    %c0_7 = arith.constant 0 : index
    %c1 = arith.constant 1 : index
    %c0_8 = arith.constant 0 : index
    %c0_9 = arith.constant 0 : index
    %14 = vector.load %arg5[%c0_7, %c1, %c0_8, %c0_9] : memref<1x4x2x128xf32, #tpu.memory_space<vmem>>, vector<1x1x2x128xf32>
    %15 = vector.shape_cast %14 : vector<1x1x2x128xf32> to vector<2x128xf32>
    %c0_10 = arith.constant 0 : index
    %c1_11 = arith.constant 1 : index
    %16 = memref.load %arg4[%c0_10, %c1_11] : memref<4x4xf32, #tpu.memory_space<smem>>
    %17 = arith.mulf %16, %4 : f32
    %18 = vector.broadcast %17 : f32 to vector<2x128xf32>
    %19 = arith.mulf %15, %18 : vector<2x128xf32>
    %20 = arith.addf %13, %19 : vector<2x128xf32>
    %c0_12 = arith.constant 0 : index
    %c2 = arith.constant 2 : index
    %c0_13 = arith.constant 0 : index
    %c0_14 = arith.constant 0 : index
    %21 = vector.load %arg5[%c0_12, %c2, %c0_13, %c0_14] : memref<1x4x2x128xf32, #tpu.memory_space<vmem>>, vector<1x1x2x128xf32>
    %22 = vector.shape_cast %21 : vector<1x1x2x128xf32> to vector<2x128xf32>
    %c0_15 = arith.constant 0 : index
    %c2_16 = arith.constant 2 : index
    %23 = memref.load %arg4[%c0_15, %c2_16] : memref<4x4xf32, #tpu.memory_space<smem>>
    %24 = arith.mulf %23, %4 : f32
    %25 = vector.broadcast %24 : f32 to vector<2x128xf32>
    %26 = arith.mulf %22, %25 : vector<2x128xf32>
    %27 = arith.addf %20, %26 : vector<2x128xf32>
    %c0_17 = arith.constant 0 : index
    %c3 = arith.constant 3 : index
    %c0_18 = arith.constant 0 : index
    %c0_19 = arith.constant 0 : index
    %28 = vector.load %arg5[%c0_17, %c3, %c0_18, %c0_19] : memref<1x4x2x128xf32, #tpu.memory_space<vmem>>, vector<1x1x2x128xf32>
    %29 = vector.shape_cast %28 : vector<1x1x2x128xf32> to vector<2x128xf32>
    %c0_20 = arith.constant 0 : index
    %c3_21 = arith.constant 3 : index
    %30 = memref.load %arg4[%c0_20, %c3_21] : memref<4x4xf32, #tpu.memory_space<smem>>
    %31 = arith.mulf %30, %4 : f32
    %32 = vector.broadcast %31 : f32 to vector<2x128xf32>
    %33 = arith.mulf %29, %32 : vector<2x128xf32>
    %34 = arith.addf %27, %33 : vector<2x128xf32>
    %c0_22 = arith.constant 0 : index
    %c0_23 = arith.constant 0 : index
    %35 = vector.load %arg10[%c0_22, %c0_23] : memref<4x1xf32, #tpu.memory_space<vmem>>, vector<1x1xf32>
    %36 = vector.broadcast %35 : vector<1x1xf32> to vector<2x128xf32>
    %37 = arith.addf %34, %36 : vector<2x128xf32>
    %c0_24 = arith.constant 0 : index
    %c0_25 = arith.constant 0 : index
    %c0_26 = arith.constant 0 : index
    %c0_27 = arith.constant 0 : index
    %38 = vector.load %arg9[%c0_24, %c0_25, %c0_26, %c0_27] : memref<1x4x2x128xf32, #tpu.memory_space<vmem>>, vector<1x1x2x128xf32>
    %39 = vector.shape_cast %38 : vector<1x1x2x128xf32> to vector<2x128xf32>
    %40 = vector.shape_cast %37 : vector<2x128xf32> to vector<1x1x2x128xf32>
    tpu.vector_store %arg9[%c0_24, %c0_25, %c0_26, %c0_27], %40 {strides = array<i32>} : memref<1x4x2x128xf32, #tpu.memory_space<vmem>>, vector<1x1x2x128xf32>,
    %c0_28 = arith.constant 0 : index
    %c0_29 = arith.constant 0 : index
    %c0_30 = arith.constant 0 : index
    %c0_31 = arith.constant 0 : index
    %41 = vector.load %arg5[%c0_28, %c0_29, %c0_30, %c0_31] : memref<1x4x2x128xf32, #tpu.memory_space<vmem>>, vector<1x1x2x128xf32>
    %42 = vector.shape_cast %41 : vector<1x1x2x128xf32> to vector<2x128xf32>
    %c1_32 = arith.constant 1 : index
    %c0_33 = arith.constant 0 : index
    %43 = memref.load %arg4[%c1_32, %c0_33] : memref<4x4xf32, #tpu.memory_space<smem>>
    %44 = arith.mulf %43, %4 : f32
    %45 = vector.broadcast %44 : f32 to vector<2x128xf32>
    %46 = arith.mulf %42, %45 : vector<2x128xf32>
    %c0_34 = arith.constant 0 : index
    %c1_35 = arith.constant 1 : index
    %c0_36 = arith.constant 0 : index
    %c0_37 = arith.constant 0 : index
    %47 = vector.load %arg5[%c0_34, %c1_35, %c0_36, %c0_37] : memref<1x4x2x128xf32, #tpu.memory_space<vmem>>, vector<1x1x2x128xf32>
    %48 = vector.shape_cast %47 : vector<1x1x2x128xf32> to vector<2x128xf32>
    %c1_38 = arith.constant 1 : index
    %c1_39 = arith.constant 1 : index
    %49 = memref.load %arg4[%c1_38, %c1_39] : memref<4x4xf32, #tpu.memory_space<smem>>
    %50 = arith.mulf %49, %4 : f32
    %51 = vector.broadcast %50 : f32 to vector<2x128xf32>
    %52 = arith.mulf %48, %51 : vector<2x128xf32>
    %53 = arith.addf %46, %52 : vector<2x128xf32>
    %c0_40 = arith.constant 0 : index
    %c2_41 = arith.constant 2 : index
    %c0_42 = arith.constant 0 : index
    %c0_43 = arith.constant 0 : index
    %54 = vector.load %arg5[%c0_40, %c2_41, %c0_42, %c0_43] : memref<1x4x2x128xf32, #tpu.memory_space<vmem>>, vector<1x1x2x128xf32>
    %55 = vector.shape_cast %54 : vector<1x1x2x128xf32> to vector<2x128xf32>
    %c1_44 = arith.constant 1 : index
    %c2_45 = arith.constant 2 : index
    %56 = memref.load %arg4[%c1_44, %c2_45] : memref<4x4xf32, #tpu.memory_space<smem>>
    %57 = arith.mulf %56, %4 : f32
    %58 = vector.broadcast %57 : f32 to vector<2x128xf32>
    %59 = arith.mulf %55, %58 : vector<2x128xf32>
    %60 = arith.addf %53, %59 : vector<2x128xf32>
    %c0_46 = arith.constant 0 : index
    %c3_47 = arith.constant 3 : index
    %c0_48 = arith.constant 0 : index
    %c0_49 = arith.constant 0 : index
    %61 = vector.load %arg5[%c0_46, %c3_47, %c0_48, %c0_49] : memref<1x4x2x128xf32, #tpu.memory_space<vmem>>, vector<1x1x2x128xf32>
    %62 = vector.shape_cast %61 : vector<1x1x2x128xf32> to vector<2x128xf32>
    %c1_50 = arith.constant 1 : index
    %c3_51 = arith.constant 3 : index
    %63 = memref.load %arg4[%c1_50, %c3_51] : memref<4x4xf32, #tpu.memory_space<smem>>
    %64 = arith.mulf %63, %4 : f32
    %65 = vector.broadcast %64 : f32 to vector<2x128xf32>
    %66 = arith.mulf %62, %65 : vector<2x128xf32>
    %67 = arith.addf %60, %66 : vector<2x128xf32>
    %c1_52 = arith.constant 1 : index
    %c0_53 = arith.constant 0 : index
    %68 = vector.load %arg10[%c1_52, %c0_53] : memref<4x1xf32, #tpu.memory_space<vmem>>, vector<1x1xf32>
    %69 = vector.broadcast %68 : vector<1x1xf32> to vector<2x128xf32>
    %70 = arith.addf %67, %69 : vector<2x128xf32>
    %c0_54 = arith.constant 0 : index
    %c1_55 = arith.constant 1 : index
    %c0_56 = arith.constant 0 : index
    %c0_57 = arith.constant 0 : index
    %71 = vector.load %arg9[%c0_54, %c1_55, %c0_56, %c0_57] : memref<1x4x2x128xf32, #tpu.memory_space<vmem>>, vector<1x1x2x128xf32>
    %72 = vector.shape_cast %71 : vector<1x1x2x128xf32> to vector<2x128xf32>
    %73 = vector.shape_cast %70 : vector<2x128xf32> to vector<1x1x2x128xf32>
    tpu.vector_store %arg9[%c0_54, %c1_55, %c0_56, %c0_57], %73 {strides = array<i32>} : memref<1x4x2x128xf32, #tpu.memory_space<vmem>>, vector<1x1x2x128xf32>,
    %c0_58 = arith.constant 0 : index
    %c0_59 = arith.constant 0 : index
    %c0_60 = arith.constant 0 : index
    %c0_61 = arith.constant 0 : index
    %74 = vector.load %arg5[%c0_58, %c0_59, %c0_60, %c0_61] : memref<1x4x2x128xf32, #tpu.memory_space<vmem>>, vector<1x1x2x128xf32>
    %75 = vector.shape_cast %74 : vector<1x1x2x128xf32> to vector<2x128xf32>
    %c2_62 = arith.constant 2 : index
    %c0_63 = arith.constant 0 : index
    %76 = memref.load %arg4[%c2_62, %c0_63] : memref<4x4xf32, #tpu.memory_space<smem>>
    %77 = arith.mulf %76, %4 : f32
    %78 = vector.broadcast %77 : f32 to vector<2x128xf32>
    %79 = arith.mulf %75, %78 : vector<2x128xf32>
    %c0_64 = arith.constant 0 : index
    %c1_65 = arith.constant 1 : index
    %c0_66 = arith.constant 0 : index
    %c0_67 = arith.constant 0 : index
    %80 = vector.load %arg5[%c0_64, %c1_65, %c0_66, %c0_67] : memref<1x4x2x128xf32, #tpu.memory_space<vmem>>, vector<1x1x2x128xf32>
    %81 = vector.shape_cast %80 : vector<1x1x2x128xf32> to vector<2x128xf32>
    %c2_68 = arith.constant 2 : index
    %c1_69 = arith.constant 1 : index
    %82 = memref.load %arg4[%c2_68, %c1_69] : memref<4x4xf32, #tpu.memory_space<smem>>
    %83 = arith.mulf %82, %4 : f32
    %84 = vector.broadcast %83 : f32 to vector<2x128xf32>
    %85 = arith.mulf %81, %84 : vector<2x128xf32>
    %86 = arith.addf %79, %85 : vector<2x128xf32>
    %c0_70 = arith.constant 0 : index
    %c2_71 = arith.constant 2 : index
    %c0_72 = arith.constant 0 : index
    %c0_73 = arith.constant 0 : index
    %87 = vector.load %arg5[%c0_70, %c2_71, %c0_72, %c0_73] : memref<1x4x2x128xf32, #tpu.memory_space<vmem>>, vector<1x1x2x128xf32>
    %88 = vector.shape_cast %87 : vector<1x1x2x128xf32> to vector<2x128xf32>
    %c2_74 = arith.constant 2 : index
    %c2_75 = arith.constant 2 : index
    %89 = memref.load %arg4[%c2_74, %c2_75] : memref<4x4xf32, #tpu.memory_space<smem>>
    %90 = arith.mulf %89, %4 : f32
    %91 = vector.broadcast %90 : f32 to vector<2x128xf32>
    %92 = arith.mulf %88, %91 : vector<2x128xf32>
    %93 = arith.addf %86, %92 : vector<2x128xf32>
    %c0_76 = arith.constant 0 : index
    %c3_77 = arith.constant 3 : index
    %c0_78 = arith.constant 0 : index
    %c0_79 = arith.constant 0 : index
    %94 = vector.load %arg5[%c0_76, %c3_77, %c0_78, %c0_79] : memref<1x4x2x128xf32, #tpu.memory_space<vmem>>, vector<1x1x2x128xf32>
    %95 = vector.shape_cast %94 : vector<1x1x2x128xf32> to vector<2x128xf32>
    %c2_80 = arith.constant 2 : index
    %c3_81 = arith.constant 3 : index
    %96 = memref.load %arg4[%c2_80, %c3_81] : memref<4x4xf32, #tpu.memory_space<smem>>
    %97 = arith.mulf %96, %4 : f32
    %98 = vector.broadcast %97 : f32 to vector<2x128xf32>
    %99 = arith.mulf %95, %98 : vector<2x128xf32>
    %100 = arith.addf %93, %99 : vector<2x128xf32>
    %c2_82 = arith.constant 2 : index
    %c0_83 = arith.constant 0 : index
    %101 = vector.load %arg10[%c2_82, %c0_83] : memref<4x1xf32, #tpu.memory_space<vmem>>, vector<1x1xf32>
    %102 = vector.broadcast %101 : vector<1x1xf32> to vector<2x128xf32>
    %103 = arith.addf %100, %102 : vector<2x128xf32>
    %c0_84 = arith.constant 0 : index
    %c2_85 = arith.constant 2 : index
    %c0_86 = arith.constant 0 : index
    %c0_87 = arith.constant 0 : index
    %104 = vector.load %arg9[%c0_84, %c2_85, %c0_86, %c0_87] : memref<1x4x2x128xf32, #tpu.memory_space<vmem>>, vector<1x1x2x128xf32>
    %105 = vector.shape_cast %104 : vector<1x1x2x128xf32> to vector<2x128xf32>
    %106 = vector.shape_cast %103 : vector<2x128xf32> to vector<1x1x2x128xf32>
    tpu.vector_store %arg9[%c0_84, %c2_85, %c0_86, %c0_87], %106 {strides = array<i32>} : memref<1x4x2x128xf32, #tpu.memory_space<vmem>>, vector<1x1x2x128xf32>,
    %c0_88 = arith.constant 0 : index
    %c0_89 = arith.constant 0 : index
    %c0_90 = arith.constant 0 : index
    %c0_91 = arith.constant 0 : index
    %107 = vector.load %arg5[%c0_88, %c0_89, %c0_90, %c0_91] : memref<1x4x2x128xf32, #tpu.memory_space<vmem>>, vector<1x1x2x128xf32>
    %108 = vector.shape_cast %107 : vector<1x1x2x128xf32> to vector<2x128xf32>
    %c3_92 = arith.constant 3 : index
    %c0_93 = arith.constant 0 : index
    %109 = memref.load %arg4[%c3_92, %c0_93] : memref<4x4xf32, #tpu.memory_space<smem>>
    %110 = arith.mulf %109, %4 : f32
    %111 = vector.broadcast %110 : f32 to vector<2x128xf32>
    %112 = arith.mulf %108, %111 : vector<2x128xf32>
    %c0_94 = arith.constant 0 : index
    %c1_95 = arith.constant 1 : index
    %c0_96 = arith.constant 0 : index
    %c0_97 = arith.constant 0 : index
    %113 = vector.load %arg5[%c0_94, %c1_95, %c0_96, %c0_97] : memref<1x4x2x128xf32, #tpu.memory_space<vmem>>, vector<1x1x2x128xf32>
    %114 = vector.shape_cast %113 : vector<1x1x2x128xf32> to vector<2x128xf32>
    %c3_98 = arith.constant 3 : index
    %c1_99 = arith.constant 1 : index
    %115 = memref.load %arg4[%c3_98, %c1_99] : memref<4x4xf32, #tpu.memory_space<smem>>
    %116 = arith.mulf %115, %4 : f32
    %117 = vector.broadcast %116 : f32 to vector<2x128xf32>
    %118 = arith.mulf %114, %117 : vector<2x128xf32>
    %119 = arith.addf %112, %118 : vector<2x128xf32>
    %c0_100 = arith.constant 0 : index
    %c2_101 = arith.constant 2 : index
    %c0_102 = arith.constant 0 : index
    %c0_103 = arith.constant 0 : index
    %120 = vector.load %arg5[%c0_100, %c2_101, %c0_102, %c0_103] : memref<1x4x2x128xf32, #tpu.memory_space<vmem>>, vector<1x1x2x128xf32>
    %121 = vector.shape_cast %120 : vector<1x1x2x128xf32> to vector<2x128xf32>
    %c3_104 = arith.constant 3 : index
    %c2_105 = arith.constant 2 : index
    %122 = memref.load %arg4[%c3_104, %c2_105] : memref<4x4xf32, #tpu.memory_space<smem>>
    %123 = arith.mulf %122, %4 : f32
    %124 = vector.broadcast %123 : f32 to vector<2x128xf32>
    %125 = arith.mulf %121, %124 : vector<2x128xf32>
    %126 = arith.addf %119, %125 : vector<2x128xf32>
    %c0_106 = arith.constant 0 : index
    %c3_107 = arith.constant 3 : index
    %c0_108 = arith.constant 0 : index
    %c0_109 = arith.constant 0 : index
    %127 = vector.load %arg5[%c0_106, %c3_107, %c0_108, %c0_109] : memref<1x4x2x128xf32, #tpu.memory_space<vmem>>, vector<1x1x2x128xf32>
    %128 = vector.shape_cast %127 : vector<1x1x2x128xf32> to vector<2x128xf32>
    %c3_110 = arith.constant 3 : index
    %c3_111 = arith.constant 3 : index
    %129 = memref.load %arg4[%c3_110, %c3_111] : memref<4x4xf32, #tpu.memory_space<smem>>
    %130 = arith.mulf %129, %4 : f32
    %131 = vector.broadcast %130 : f32 to vector<2x128xf32>
    %132 = arith.mulf %128, %131 : vector<2x128xf32>
    %133 = arith.addf %126, %132 : vector<2x128xf32>
    %c3_112 = arith.constant 3 : index
    %c0_113 = arith.constant 0 : index
    %134 = vector.load %arg10[%c3_112, %c0_113] : memref<4x1xf32, #tpu.memory_space<vmem>>, vector<1x1xf32>
    %135 = vector.broadcast %134 : vector<1x1xf32> to vector<2x128xf32>
    %136 = arith.addf %133, %135 : vector<2x128xf32>
    %c0_114 = arith.constant 0 : index
    %c3_115 = arith.constant 3 : index
    %c0_116 = arith.constant 0 : index
    %c0_117 = arith.constant 0 : index
    %137 = vector.load %arg9[%c0_114, %c3_115, %c0_116, %c0_117] : memref<1x4x2x128xf32, #tpu.memory_space<vmem>>, vector<1x1x2x128xf32>
    %138 = vector.shape_cast %137 : vector<1x1x2x128xf32> to vector<2x128xf32>
    %139 = vector.shape_cast %136 : vector<2x128xf32> to vector<1x1x2x128xf32>
    tpu.vector_store %arg9[%c0_114, %c3_115, %c0_116, %c0_117], %139 {strides = array<i32>} : memref<1x4x2x128xf32, #tpu.memory_space<vmem>>, vector<1x1x2x128xf32>,
    return
  }
  func.func @transform_0(%arg0: i32, %arg1: i32) -> i32 {
    %c0_i32 = arith.constant 0 : i32
    %c0_i32_0 = arith.constant 0 : i32
    return %c0_i32 : i32
  }
  func.func @transform_1(%arg0: i32, %arg1: i32) -> i32 {
    %c0_i32 = arith.constant 0 : i32
    %c0_i32_0 = arith.constant 0 : i32
    return %c0_i32 : i32
  }
  func.func @transform_2(%arg0: i32, %arg1: i32) -> (i32, i32) {
    %c0_i32 = arith.constant 0 : i32
    %c0_i32_0 = arith.constant 0 : i32
    %c0_i32_1 = arith.constant 0 : i32
    return %c0_i32, %c0_i32_0 : i32, i32
  }
  func.func @transform_3(%arg0: i32, %arg1: i32) -> (i32, i32, i32, i32) {
    %c0_i32 = arith.constant 0 : i32
    %c0_i32_0 = arith.constant 0 : i32
    %c0_i32_1 = arith.constant 0 : i32
    return %arg0, %c0_i32, %arg1, %c0_i32_0 : i32, i32, i32, i32
  }
  func.func @transform_4(%arg0: i32, %arg1: i32) -> (i32, i32, i32) {
    %c0_i32 = arith.constant 0 : i32
    %c0_i32_0 = arith.constant 0 : i32
    %c0_i32_1 = arith.constant 0 : i32
    return %arg0, %c0_i32, %c0_i32_0 : i32, i32, i32
  }
  func.func @transform_5(%arg0: i32, %arg1: i32) -> (i32, i32, i32) {
    %c0_i32 = arith.constant 0 : i32
    %c0_i32_0 = arith.constant 0 : i32
    %c0_i32_1 = arith.constant 0 : i32
    return %arg0, %c0_i32, %c0_i32_0 : i32, i32, i32
  }
  func.func @transform_6(%arg0: i32, %arg1: i32) -> (i32, i32) {
    %c0_i32 = arith.constant 0 : i32
    %c0_i32_0 = arith.constant 0 : i32
    %c0_i32_1 = arith.constant 0 : i32
    return %c0_i32, %c0_i32_0 : i32, i32
  }
  func.func @transform_7(%arg0: i32, %arg1: i32) -> (i32, i32, i32, i32) {
    %c0_i32 = arith.constant 0 : i32
    %c0_i32_0 = arith.constant 0 : i32
    %c0_i32_1 = arith.constant 0 : i32
    return %arg0, %c0_i32, %arg1, %c0_i32_0 : i32, i32, i32, i32
  }
}

</mosaic_0001>

<llo_original>
// kernel: cfg_denoiser_forward.1
$region0: #{cfg_denoiser_forward.1}
  #allocation0 [shape = 'u32[]', space=smem, size = 0x4, offset = 0x4, fixed_abs, tag = 'smem constant byte address 0x4 - core index']
  #allocation1 [shape = 'u32[72,128]{1,0:T(1,128)}', space=vmem, size = 0x9000, scoped, tag = 'internal scratch']
  #allocation2 [shape = 'f32[4,1]{1,0:T(4,128)}', space=vmem, size = 0x800, scoped, tag = 'scratch operand']
  #allocation3 [shape = 'f32[1]{0:T(128)S(6)}', space=smem, size = 0x200, scoped, tag = 'scoped memory for cfg_denoiser_forward.1']
  %s0 = inlined_call_operand.vmem [shape: f32[2], index: 0, kind: input, shape index: {}]
  %s1 = inlined_call_operand.<no memory space> [shape: f32[1], index: 1, kind: input, shape index: {}]
  %s2 = inlined_call_operand.vmem [shape: f32[4,4], index: 2, kind: input, shape index: {}]
  %s3 = inlined_call_operand.vmem [shape: f32[2,4,2,128], index: 3, kind: input, shape index: {}]
  %s4 = inlined_call_operand.vmem [shape: f32[2,8,32], index: 4, kind: input, shape index: {}]
  %s5 = inlined_call_operand.vmem [shape: f32[2,8,32], index: 5, kind: input, shape index: {}]
  %s6 = inlined_call_operand.vmem [shape: f32[4,32], index: 6, kind: input, shape index: {}]
  %s7 = inlined_call_operand.vmem [shape: f32[2,4,2,128], index: 7, kind: output, shape index: {}]
  %s8 = sld [smem:[#allocation0]]
  $region73: #{cfg_denoiser_forward.1} parent=0
    _
  %s10 = ssub.s32 1, %s8
  %s11 = scalar_select 0, %s10, %s8
  %12 = sst [smem:[#allocation3]] %s1
  $region1: #{cfg_denoiser_forward.1} parent=0
    #allocation4 [shape = 'u8[512]{0}', space=smem, size = 0x200, scoped, tag = 'input window, operand 0, single buffered']
    #allocation5 [shape = 's32[2]{0}', space=sflag, size = 0x8, scoped, tag = 'scoped memory for cfg_denoiser_forward.1']
    #allocation6 [shape = 'u8[2048]{0}', space=smem, size = 0x800, scoped, tag = 'input window, operand 2, single buffered']
    #allocation7 [shape = 's32[1]{0}', space=sflag, size = 0x4, scoped, tag = 'scoped memory for cfg_denoiser_forward.1']
    %13 = vsyncpa [#allocation5], 0
    %14 = vsyncpa [#allocation7], 0
    loop: start=0, step=1, limit=4
    $region2: #{cfg_denoiser_forward.1} parent=1 // loop_pre_header
      _
    $region3: #{cfg_denoiser_forward.1} parent=1 // loop_header
      %s16 = sphi 0, %s20
      %p17 = scmp.ge.s32.totalorder %s16, 4
      %s23 = sphi 0, %s35
      %s24 = sphi 0, %s31
      %s25 = sphi 0, %s23
      %s26 = sphi 0, %s24
      %s27 = sphi 0, %s25
      %s28 = sphi 0, %s26
      %s36 = sphi 0, %s36
      %s38 = sphi 0, %s36
      %s39 = sphi 0, %s38
      %s53 = sphi 0, %s39
      %s57 = sphi 0, %s57
      %s59 = sphi 0, %s57
      %s60 = sphi 0, %s59
      %s74 = sphi 0, %s60
      %s78 = sphi 0, %s78
      %s80 = sphi 0, %s78
      %s81 = sphi 0, %s80
      %s95 = sphi 0, %s81
      %s103 = sphi 0, %s105
      %s106 = sphi 0, %s103
      %s107 = sphi 0, %s106
      %s123 = sphi 0, %s107
      %s129 = sphi 0, %s131
      %s132 = sphi 0, %s129
      %s133 = sphi 0, %s132
      %s149 = sphi 0, %s133
      %s155 = sphi 0, %s157
      %s158 = sphi 0, %s155
      %s159 = sphi 0, %s158
      %s175 = sphi 0, %s159
      %s179 = sphi 0, %s179
      %s181 = sphi 0, %s179
      %s182 = sphi 0, %s181
      %s196 = sphi 0, %s182
      %s204 = sphi 0, %s206
      %s207 = sphi 0, %s204
      %s208 = sphi 0, %s207
      %s224 = sphi 0, %s208
    $region4: #{cfg_denoiser_forward.1} parent=1 // loop_header_branch
      %19 = sbr.rel (%p17) target = $region8
    $region5: #{cfg_denoiser_forward.1} parent=1 // loop_body
      %s21 = ssub.s32 %s16, 1
      %s22 = ssub.s32 %s16, 2
      %s29 = sadd.s32 1, %s24
      %p30 = scmp.ge.s32.totalorder %s29, 1
      %s31 = scalar_select %p30, 0, %s29
      %s32 = sadd.s32 1, %s23
      %s33 = scalar_select %p30, %s32, %s23
      %p34 = scmp.ge.s32.totalorder %s33, 2
      %s35 = scalar_select %p34, 0, %s33
      %s37 = sadd.s32 %s36, 1
      %p40 = scmp.eq.s32.totalorder %s16, 1
      %p41 = scmp.ne.s32.totalorder %s36, %s38
      %p42 = scmp.eq.s32.totalorder %s16, 0
      %p43 = por %p41, %p42
      %p44 = scmp.ne.s32.totalorder %s36, %s38
      %p45 = scmp.eq.s32.totalorder %s21, 1
      %p46 = por %p44, %p45
      %p47 = scmp.ne.s32.totalorder %s38, %s39
      %p48 = scmp.eq.s32.totalorder %s21, 0
      %p49 = por %p47, %p48
      %p50 = scmp.ne.s32.totalorder %s38, %s39
      %p51 = scmp.eq.s32.totalorder %s22, 1
      %p52 = por %p50, %p51
      %p54 = scmp.ne.s32.totalorder %s39, %s53
      %p55 = scmp.eq.s32.totalorder %s22, 0
      %p56 = por %p54, %p55
      %s58 = sadd.s32 %s57, 1
      %p61 = scmp.eq.s32.totalorder %s16, 1
      %p62 = scmp.ne.s32.totalorder %s57, %s59
      %p63 = scmp.eq.s32.totalorder %s16, 0
      %p64 = por %p62, %p63
      %p65 = scmp.ne.s32.totalorder %s57, %s59
      %p66 = scmp.eq.s32.totalorder %s21, 1
      %p67 = por %p65, %p66
      %p68 = scmp.ne.s32.totalorder %s59, %s60
      %p69 = scmp.eq.s32.totalorder %s21, 0
      %p70 = por %p68, %p69
      %p71 = scmp.ne.s32.totalorder %s59, %s60
      %p72 = scmp.eq.s32.totalorder %s22, 1
      %p73 = por %p71, %p72
      %p75 = scmp.ne.s32.totalorder %s60, %s74
      %p76 = scmp.eq.s32.totalorder %s22, 0
      %p77 = por %p75, %p76
      %s79 = sadd.s32 %s78, 1
      %p82 = scmp.eq.s32.totalorder %s16, 1
      %p83 = scmp.ne.s32.totalorder %s78, %s80
      %p84 = scmp.eq.s32.totalorder %s16, 0
      %p85 = por %p83, %p84
      %p86 = scmp.ne.s32.totalorder %s78, %s80
      %p87 = scmp.eq.s32.totalorder %s21, 1
      %p88 = por %p86, %p87
      %p89 = scmp.ne.s32.totalorder %s80, %s81
      %p90 = scmp.eq.s32.totalorder %s21, 0
      %p91 = por %p89, %p90
      %p92 = scmp.ne.s32.totalorder %s80, %s81
      %p93 = scmp.eq.s32.totalorder %s22, 1
      %p94 = por %p92, %p93
      %p96 = scmp.ne.s32.totalorder %s81, %s95
      %p97 = scmp.eq.s32.totalorder %s22, 0
      %p98 = por %p96, %p97
      %s99 = ssub.s32 %s23, %s35
      %s100 = ssub.s32 %s24, %s31
      %s101 = sor.u32 %s99, %s100
      %p102 = scmp.eq.s32.totalorder %s101, 0
      %s104 = sadd.s32 %s103, 1
      %s105 = scalar_select %p102, %s103, %s104
      %p108 = pneg %p102
      %p109 = scmp.eq.s32.totalorder %s16, 1
      %p110 = por %p108, %p109
      %p111 = scmp.ne.s32.totalorder %s103, %s106
      %p112 = scmp.eq.s32.totalorder %s16, 0
      %p113 = por %p111, %p112
      %p114 = scmp.ne.s32.totalorder %s103, %s106
      %p115 = scmp.eq.s32.totalorder %s21, 1
      %p116 = por %p114, %p115
      %p117 = scmp.ne.s32.totalorder %s106, %s107
      %p118 = scmp.eq.s32.totalorder %s21, 0
      %p119 = por %p117, %p118
      %p120 = scmp.ne.s32.totalorder %s106, %s107
      %p121 = scmp.eq.s32.totalorder %s22, 1
      %p122 = por %p120, %p121
      %p124 = scmp.ne.s32.totalorder %s107, %s123
      %p125 = scmp.eq.s32.totalorder %s22, 0
      %p126 = por %p124, %p125
      %s127 = ssub.s32 %s23, %s35
      %p128 = scmp.eq.s32.totalorder %s127, 0
      %s130 = sadd.s32 %s129, 1
      %s131 = scalar_select %p128, %s129, %s130
      %p134 = pneg %p128
      %p135 = scmp.eq.s32.totalorder %s16, 1
      %p136 = por %p134, %p135
      %p137 = scmp.ne.s32.totalorder %s129, %s132
      %p138 = scmp.eq.s32.totalorder %s16, 0
      %p139 = por %p137, %p138
      %p140 = scmp.ne.s32.totalorder %s129, %s132
      %p141 = scmp.eq.s32.totalorder %s21, 1
      %p142 = por %p140, %p141
      %p143 = scmp.ne.s32.totalorder %s132, %s133
      %p144 = scmp.eq.s32.totalorder %s21, 0
      %p145 = por %p143, %p144
      %p146 = scmp.ne.s32.totalorder %s132, %s133
      %p147 = scmp.eq.s32.totalorder %s22, 1
      %p148 = por %p146, %p147
      %p150 = scmp.ne.s32.totalorder %s133, %s149
      %p151 = scmp.eq.s32.totalorder %s22, 0
      %p152 = por %p150, %p151
      %s153 = ssub.s32 %s23, %s35
      %p154 = scmp.eq.s32.totalorder %s153, 0
      %s156 = sadd.s32 %s155, 1
      %s157 = scalar_select %p154, %s155, %s156
      %p160 = pneg %p154
      %p161 = scmp.eq.s32.totalorder %s16, 1
      %p162 = por %p160, %p161
      %p163 = scmp.ne.s32.totalorder %s155, %s158
      %p164 = scmp.eq.s32.totalorder %s16, 0
      %p165 = por %p163, %p164
      %p166 = scmp.ne.s32.totalorder %s155, %s158
      %p167 = scmp.eq.s32.totalorder %s21, 1
      %p168 = por %p166, %p167
      %p169 = scmp.ne.s32.totalorder %s158, %s159
      %p170 = scmp.eq.s32.totalorder %s21, 0
      %p171 = por %p169, %p170
      %p172 = scmp.ne.s32.totalorder %s158, %s159
      %p173 = scmp.eq.s32.totalorder %s22, 1
      %p174 = por %p172, %p173
      %p176 = scmp.ne.s32.totalorder %s159, %s175
      %p177 = scmp.eq.s32.totalorder %s22, 0
      %p178 = por %p176, %p177
      %s180 = sadd.s32 %s179, 1
      %p183 = scmp.eq.s32.totalorder %s16, 1
      %p184 = scmp.ne.s32.totalorder %s179, %s181
      %p185 = scmp.eq.s32.totalorder %s16, 0
      %p186 = por %p184, %p185
      %p187 = scmp.ne.s32.totalorder %s179, %s181
      %p188 = scmp.eq.s32.totalorder %s21, 1
      %p189 = por %p187, %p188
      %p190 = scmp.ne.s32.totalorder %s181, %s182
      %p191 = scmp.eq.s32.totalorder %s21, 0
      %p192 = por %p190, %p191
      %p193 = scmp.ne.s32.totalorder %s181, %s182
      %p194 = scmp.eq.s32.totalorder %s22, 1
      %p195 = por %p193, %p194
      %p197 = scmp.ne.s32.totalorder %s182, %s196
      %p198 = scmp.eq.s32.totalorder %s22, 0
      %p199 = por %p197, %p198
      %s200 = ssub.s32 %s23, %s35
      %s201 = ssub.s32 %s24, %s31
      %s202 = sor.u32 %s200, %s201
      %p203 = scmp.eq.s32.totalorder %s202, 0
      %s205 = sadd.s32 %s204, 1
      %s206 = scalar_select %p203, %s204, %s205
      %p209 = pneg %p203
      %p210 = scmp.eq.s32.totalorder %s16, 1
      %p211 = por %p209, %p210
      %p212 = scmp.ne.s32.totalorder %s204, %s207
      %p213 = scmp.eq.s32.totalorder %s16, 0
      %p214 = por %p212, %p213
      %p215 = scmp.ne.s32.totalorder %s204, %s207
      %p216 = scmp.eq.s32.totalorder %s21, 1
      %p217 = por %p215, %p216
      %p218 = scmp.ne.s32.totalorder %s207, %s208
      %p219 = scmp.eq.s32.totalorder %s21, 0
      %p220 = por %p218, %p219
      %p221 = scmp.ne.s32.totalorder %s207, %s208
      %p222 = scmp.eq.s32.totalorder %s22, 1
      %p223 = por %p221, %p222
      %p225 = scmp.ne.s32.totalorder %s208, %s224
      %p226 = scmp.eq.s32.totalorder %s22, 0
      %p227 = por %p225, %p226
      %p228 = scmp.le.s32.totalorder 1, %s16
      %p229 = scmp.lt.s32.totalorder %s16, 3
      %p230 = pnand %p228, %p229
      %p231 = pneg %p230
      // Predicated region
      $region9: #{cfg_denoiser_forward.1} parent=5 // pred_check
        _
      $region10: #{cfg_denoiser_forward.1} parent=5 // pred_check_branch
        %233 = sbr.rel (%p230) target = $region12
      $region11: #{cfg_denoiser_forward.1} parent=5 // pred_region
        %s234 = ssub.s32 %s16, 1
        // Predicated region
        $region13: #{cfg_denoiser_forward.1} parent=11 // pred_check
          %p235 = pneg %p49
        $region14: #{cfg_denoiser_forward.1} parent=11 // pred_check_branch
          %237 = sbr.rel (%p235) target = $region16
        $region15: #{cfg_denoiser_forward.1} parent=11 // pred_region
          %239 = vsyncadd [#allocation5], 0
          %s241 = sshll.u32 %s0, 4
          %s242 = int_to_ptr.vmem [resolvable:$true] %s241
          %244 = dma.vmem_to_smem %s242, 16, [#allocation4], [#allocation5]
        $region16: #{cfg_denoiser_forward.1} parent=11 // pred_fallthru
          _
        // Predicated region
        $region17: #{cfg_denoiser_forward.1} parent=11 // pred_check
          %p245 = pneg %p70
        $region18: #{cfg_denoiser_forward.1} parent=11 // pred_check_branch
          %247 = sbr.rel (%p245) target = $region20
        $region19: #{cfg_denoiser_forward.1} parent=11 // pred_region
          _
        $region20: #{cfg_denoiser_forward.1} parent=11 // pred_fallthru
          _
        // Predicated region
        $region21: #{cfg_denoiser_forward.1} parent=11 // pred_check
          %p248 = pneg %p91
        $region22: #{cfg_denoiser_forward.1} parent=11 // pred_check_branch
          %250 = sbr.rel (%p248) target = $region24
        $region23: #{cfg_denoiser_forward.1} parent=11 // pred_region
          %252 = vsyncadd [#allocation7], 0
          %s254 = sshll.u32 %s2, 4
          %s255 = int_to_ptr.vmem [resolvable:$true] %s254
          %257 = dma.vmem_to_smem %s255, 64, [#allocation6], [#allocation7]
        $region24: #{cfg_denoiser_forward.1} parent=11 // pred_fallthru
          _
        // Predicated region
        $region25: #{cfg_denoiser_forward.1} parent=11 // pred_check
          %p258 = pneg %p192
        $region26: #{cfg_denoiser_forward.1} parent=11 // pred_check_branch
          %260 = sbr.rel (%p258) target = $region28
        $region27: #{cfg_denoiser_forward.1} parent=11 // pred_region
          _
        $region28: #{cfg_denoiser_forward.1} parent=11 // pred_fallthru
          _
      $region12: #{cfg_denoiser_forward.1} parent=5 // pred_fallthru
        _
      %p261 = scmp.lt.s32.totalorder %s16, 2
      // Predicated region
      $region29: #{cfg_denoiser_forward.1} parent=5 // pred_check
        %p262 = pneg %p261
      $region30: #{cfg_denoiser_forward.1} parent=5 // pred_check_branch
        %264 = sbr.rel (%p262) target = $region32
      $region31: #{cfg_denoiser_forward.1} parent=5 // pred_region
        // Predicated region
        $region33: #{cfg_denoiser_forward.1} parent=31 // pred_check
          %p265 = pneg %p113
        $region34: #{cfg_denoiser_forward.1} parent=31 // pred_check_branch
          %267 = sbr.rel (%p265) target = $region36
        $region35: #{cfg_denoiser_forward.1} parent=31 // pred_region
          %p268 = scmp.lt.s32.totalorder %s23, 1
          %s269 = scalar_select %p268, %s23, 1
          %p270 = scmp.lt.s32.totalorder %s24, 0
          %s271 = scalar_select %p270, %s24, 0
          %s272 = smul.addr %s269, 4
          %s273 = sadd.s32 %s271, %s272
          %s274 = smul.addr %s273, 2
          %s275 = scalar_lea.vmem %s3, %s274
        $region36: #{cfg_denoiser_forward.1} parent=31 // pred_fallthru
          _
        // Predicated region
        $region37: #{cfg_denoiser_forward.1} parent=31 // pred_check
          %p276 = pneg %p139
        $region38: #{cfg_denoiser_forward.1} parent=31 // pred_check_branch
          %278 = sbr.rel (%p276) target = $region40
        $region39: #{cfg_denoiser_forward.1} parent=31 // pred_region
          %p279 = scmp.lt.s32.totalorder %s23, 1
          %s280 = scalar_select %p279, %s23, 1
          %s281 = smul.addr %s280, 8
          %s282 = scalar_lea.vmem %s4, %s281
        $region40: #{cfg_denoiser_forward.1} parent=31 // pred_fallthru
          _
        // Predicated region
        $region41: #{cfg_denoiser_forward.1} parent=31 // pred_check
          %p283 = pneg %p165
        $region42: #{cfg_denoiser_forward.1} parent=31 // pred_check_branch
          %285 = sbr.rel (%p283) target = $region44
        $region43: #{cfg_denoiser_forward.1} parent=31 // pred_region
          %p286 = scmp.lt.s32.totalorder %s23, 1
          %s287 = scalar_select %p286, %s23, 1
          %s288 = smul.addr %s287, 8
          %s289 = scalar_lea.vmem %s5, %s288
        $region44: #{cfg_denoiser_forward.1} parent=31 // pred_fallthru
          _
      $region32: #{cfg_denoiser_forward.1} parent=5 // pred_fallthru
        _
      %p290 = scmp.le.s32.totalorder 1, %s16
      %p291 = scmp.lt.s32.totalorder %s16, 3
      %p292 = pnand %p290, %p291
      %p293 = pneg %p292
      // Predicated region
      $region45: #{cfg_denoiser_forward.1} parent=5 // pred_check
        _
      $region46: #{cfg_denoiser_forward.1} parent=5 // pred_check_branch
        %295 = sbr.rel (%p292) target = $region48
      $region47: #{cfg_denoiser_forward.1} parent=5 // pred_region
        %s296 = ssub.s32 %s16, 1
        // Predicated region
        $region49: #{cfg_denoiser_forward.1} parent=47 // pred_check
          %p297 = pneg %p49
        $region50: #{cfg_denoiser_forward.1} parent=47 // pred_check_branch
          %299 = sbr.rel (%p297) target = $region52
        $region51: #{cfg_denoiser_forward.1} parent=47 // pred_region
          %301 = dma.done [#allocation5], 16
        $region52: #{cfg_denoiser_forward.1} parent=47 // pred_fallthru
          _
        // Predicated region
        $region53: #{cfg_denoiser_forward.1} parent=47 // pred_check
          %p302 = pneg %p91
        $region54: #{cfg_denoiser_forward.1} parent=47 // pred_check_branch
          %304 = sbr.rel (%p302) target = $region56
        $region55: #{cfg_denoiser_forward.1} parent=47 // pred_region
          %306 = dma.done [#allocation7], 64
        $region56: #{cfg_denoiser_forward.1} parent=47 // pred_fallthru
          _
        %307 = sfence
        %p308 = pneg %p49
        %p309 = pneg %p46
        %p310 = pneg %p70
        %p311 = pneg %p67
        %p312 = pneg %p91
        %p313 = pneg %p88
        %p314 = scmp.lt.s32.totalorder %s25, 1
        %s315 = scalar_select %p314, %s25, 1
        %p316 = scmp.lt.s32.totalorder %s26, 0
        %s317 = scalar_select %p316, %s26, 0
        %s318 = smul.addr %s315, 4
        %s319 = sadd.s32 %s317, %s318
        %s320 = smul.addr %s319, 2
        %s321 = scalar_lea.vmem %s3, %s320
        %p322 = pneg %p119
        %p323 = pneg %p116
        %p324 = scmp.lt.s32.totalorder %s25, 1
        %s325 = scalar_select %p324, %s25, 1
        %s326 = smul.addr %s325, 8
        %s327 = scalar_lea.vmem %s4, %s326
        %p328 = pneg %p145
        %p329 = pneg %p142
        %p330 = scmp.lt.s32.totalorder %s25, 1
        %s331 = scalar_select %p330, %s25, 1
        %s332 = smul.addr %s331, 8
        %s333 = scalar_lea.vmem %s5, %s332
        %p334 = pneg %p171
        %p335 = pneg %p168
        %p336 = pneg %p192
        %p337 = pneg %p189
        %p338 = pneg %p220
        %p339 = pneg %p217
        %p340 = scmp.lt.s32.totalorder %s25, 1
        %s341 = scalar_select %p340, %s25, 1
        %p342 = scmp.lt.s32.totalorder %s26, 0
        %s343 = scalar_select %p342, %s26, 0
        %s344 = smul.addr %s341, 4
        %s345 = sadd.s32 %s343, %s344
        %s346 = smul.addr %s345, 2
        %s347 = scalar_lea.vmem %s7, %s346
        %p348 = scmp.lt.s32.totalorder %s25, 1
        %s349 = scalar_select %p348, %s25, 1
        %p350 = scmp.lt.s32.totalorder %s26, 0
        %s351 = scalar_select %p350, %s26, 0
        %s352 = smul.addr %s349, 4
        %s353 = sadd.s32 %s351, %s352
        %s354 = smul.addr %s353, 2
        %s355 = scalar_lea.vmem %s3, %s354
        %p356 = scmp.lt.s32.totalorder %s25, 1
        %s357 = scalar_select %p356, %s25, 1
        %s358 = smul.addr %s357, 8
        %s359 = scalar_lea.vmem %s4, %s358
        %p360 = scmp.lt.s32.totalorder %s25, 1
        %s361 = scalar_select %p360, %s25, 1
        %s362 = smul.addr %s361, 8
        %s363 = scalar_lea.vmem %s5, %s362
        %p364 = scmp.lt.s32.totalorder %s25, 1
        %s365 = scalar_select %p364, %s25, 1
        %p366 = scmp.lt.s32.totalorder %s26, 0
        %s367 = scalar_select %p366, %s26, 0
        %s368 = smul.addr %s365, 4
        %s369 = sadd.s32 %s367, %s368
        %s370 = smul.addr %s369, 2
        %s371 = scalar_lea.vmem %s7, %s370
        %s372 = sld [smem:[#allocation4 + %s25]]
        %s373 = smul.f32 %s372, %s372
        %s374 = sadd.f32 %s373, 1.0
        %v375 = vstv %s374
        %v376 = vrcp.pop %v375
        %v377 = vmul.f32 %v375, %v376
        %v378 = vsub.f32 1.0, %v377
        %v379 = vmul.f32 %v376, %v378
        %v380 = vadd.f32 %v376, %v379
        %vm381 = vweird.f32 %v375
        %vm382 = vweird.f32 %v376
        %vm383 = vmor %vm381, %vm382
        %v384 = vsel %vm383, %v376, %v380
        %v385 = vand.u32 2147483647, %v375
        %vm386 = vcmp.eq.f32.partialorder %v385, 8.507059e+37
        %v387 = vand.u32 %v375, 2147483648
        %v388 = vor.u32 1.1754944e-38, %v387
        %v389 = vsel %vm386, %v388, %v384
        %s390 = vtos %v389
        %p391 = scmp.eq.s32.totalorder %s26, 0
        // Predicated region
        $region57: #{cfg_denoiser_forward.1} parent=47 // pred_check
          %p392 = pneg %p391
        $region58: #{cfg_denoiser_forward.1} parent=47 // pred_check_branch
          %394 = sbr.rel (%p392) target = $region60
        $region59: #{cfg_denoiser_forward.1} parent=47 // pred_region
          %s395 = sld [smem:[#allocation3]]
          %v396 = vld [vmem:[%s6] sm:$0xf]
          %v397 = vld [vmem:[%s359] sm:$0xff]
          %vm398 = vcmask 261120
          %v399 = vsel %vm398, %v397, 0.0
          %v400 = vrot.slane %v399, 4
          %v401 = vadd.f32 %v399, %v400
          %v402 = vrot.slane %v401, 2
          %v403 = vadd.f32 %v401, %v402
          %v404 = vrot.slane %v403, 1
          %v405 = vadd.f32 %v403, %v404
          %v406 = vrcp.pop 8.0
          %v407 = vmul.f32 8.0, %v406
          %v408 = vsub.f32 1.0, %v407
          %v409 = vmul.f32 %v406, %v408
          %v410 = vadd.f32 %v406, %v409
          %vm411 = vweird.f32 %v406
          %v412 = vsel %vm411, %v406, %v410
          %v413 = vmul.f32 %v405, %v412
          %v414 = vld [vmem:[%s363] sm:$0xff]
          %v415 = vsel %vm398, %v414, 0.0
          %v416 = vrot.slane %v415, 4
          %v417 = vadd.f32 %v415, %v416
          %v418 = vrot.slane %v417, 2
          %v419 = vadd.f32 %v417, %v418
          %v420 = vrot.slane %v419, 1
          %v421 = vadd.f32 %v419, %v420
          %v422 = vmul.f32 %v421, %v412
          %v423 = vmul.f32 %v396, %v413
          %vm424 = vcmask 257024
          %v425 = vsel %vm424, %v423, 0.0
          %426 = vadd.xlane.f32.xlu0 %v425
          %v427 = vpop.xlane.xlu0 %426
          %v428 = vmul.f32 %v396, %v422
          %v429 = vsel %vm424, %v428, 0.0
          %430 = vadd.xlane.f32.xlu0 %v429
          %v431 = vpop.xlane.xlu0 %430
          %v432 = vsub.f32 %v431, %v427
          %v433 = vstv %s395
          %v434 = vmul.f32 %v432, %v433
          %v435 = vadd.f32 %v427, %v434
          %vm436 = vcmask 3072
          %437 = vst.msk [vmem:[#allocation2] sm:$0xf] %vm436, %v435
        $region60: #{cfg_denoiser_forward.1} parent=47 // pred_fallthru
          _
        %v438 = vld [vmem:[%s355] sm:$0x3]
        %s439 = sld [smem:[#allocation6]]
        %s440 = smul.f32 %s439, %s390
        %v441 = vstv %s440
        %v442 = vmul.f32 %v438, %v441
        %s443 = scalar_lea.vmem %s355, 2
        %v444 = vld [vmem:[%s443] sm:$0x3]
        %s445 = sld [smem:[#allocation6 + $0x1]]
        %s446 = smul.f32 %s445, %s390
        %v447 = vstv %s446
        %v448 = vmul.f32 %v444, %v447
        %v449 = vadd.f32 %v442, %v448
        %s450 = scalar_lea.vmem %s355, 4
        %v451 = vld [vmem:[%s450] sm:$0x3]
        %s452 = sld [smem:[#allocation6 + $0x2]]
        %s453 = smul.f32 %s452, %s390
        %v454 = vstv %s453
        %v455 = vmul.f32 %v451, %v454
        %v456 = vadd.f32 %v449, %v455
        %s457 = scalar_lea.vmem %s355, 6
        %v458 = vld [vmem:[%s457] sm:$0x3]
        %s459 = sld [smem:[#allocation6 + $0x3]]
        %s460 = smul.f32 %s459, %s390
        %v461 = vstv %s460
        %v462 = vmul.f32 %v458, %v461
        %v463 = vadd.f32 %v456, %v462
        %v464 = vld [vmem:[#allocation2] sm:$0x1]
        %s466 = vtos %v464
        %v467 = vstv %s466
        %v469 = vadd.f32 %v463, %v467
        %470 = vst [vmem:[%s371] sm:$0x3] %v469
        %v471 = vld [vmem:[%s355] sm:$0x3]
        %s472 = sld [smem:[#allocation6 + $0x80]]
        %s473 = smul.f32 %s472, %s390
        %v474 = vstv %s473
        %v475 = vmul.f32 %v471, %v474
        %v476 = vld [vmem:[%s443] sm:$0x3]
        %s477 = sld [smem:[#allocation6 + $0x81]]
        %s478 = smul.f32 %s477, %s390
        %v479 = vstv %s478
        %v480 = vmul.f32 %v476, %v479
        %v481 = vadd.f32 %v475, %v480
        %v482 = vld [vmem:[%s450] sm:$0x3]
        %s483 = sld [smem:[#allocation6 + $0x82]]
        %s484 = smul.f32 %s483, %s390
        %v485 = vstv %s484
        %v486 = vmul.f32 %v482, %v485
        %v487 = vadd.f32 %v481, %v486
        %v488 = vld [vmem:[%s457] sm:$0x3]
        %s489 = sld [smem:[#allocation6 + $0x83]]
        %s490 = smul.f32 %s489, %s390
        %v491 = vstv %s490
        %v492 = vmul.f32 %v488, %v491
        %v493 = vadd.f32 %v487, %v492
        %v494 = vld [vmem:[#allocation2 + $0x1] sm:$0x1]
        %s496 = vtos %v494
        %v497 = vstv %s496
        %v499 = vadd.f32 %v493, %v497
        %s500 = scalar_lea.vmem %s371, 2
        %501 = vst [vmem:[%s500] sm:$0x3] %v499
        %v502 = vld [vmem:[%s355] sm:$0x3]
        %s503 = sld [smem:[#allocation6 + $0x100]]
        %s504 = smul.f32 %s503, %s390
        %v505 = vstv %s504
        %v506 = vmul.f32 %v502, %v505
        %v507 = vld [vmem:[%s443] sm:$0x3]
        %s508 = sld [smem:[#allocation6 + $0x101]]
        %s509 = smul.f32 %s508, %s390
        %v510 = vstv %s509
        %v511 = vmul.f32 %v507, %v510
        %v512 = vadd.f32 %v506, %v511
        %v513 = vld [vmem:[%s450] sm:$0x3]
        %s514 = sld [smem:[#allocation6 + $0x102]]
        %s515 = smul.f32 %s514, %s390
        %v516 = vstv %s515
        %v517 = vmul.f32 %v513, %v516
        %v518 = vadd.f32 %v512, %v517
        %v519 = vld [vmem:[%s457] sm:$0x3]
        %s520 = sld [smem:[#allocation6 + $0x103]]
        %s521 = smul.f32 %s520, %s390
        %v522 = vstv %s521
        %v523 = vmul.f32 %v519, %v522
        %v524 = vadd.f32 %v518, %v523
        %v525 = vld [vmem:[#allocation2 + $0x2] sm:$0x1]
        %s527 = vtos %v525
        %v528 = vstv %s527
        %v530 = vadd.f32 %v524, %v528
        %s531 = scalar_lea.vmem %s371, 4
        %532 = vst [vmem:[%s531] sm:$0x3] %v530
        %v533 = vld [vmem:[%s355] sm:$0x3]
        %s534 = sld [smem:[#allocation6 + $0x180]]
        %s535 = smul.f32 %s534, %s390
        %v536 = vstv %s535
        %v537 = vmul.f32 %v533, %v536
        %v538 = vld [vmem:[%s443] sm:$0x3]
        %s539 = sld [smem:[#allocation6 + $0x181]]
        %s540 = smul.f32 %s539, %s390
        %v541 = vstv %s540
        %v542 = vmul.f32 %v538, %v541
        %v543 = vadd.f32 %v537, %v542
        %v544 = vld [vmem:[%s450] sm:$0x3]
        %s545 = sld [smem:[#allocation6 + $0x182]]
        %s546 = smul.f32 %s545, %s390
        %v547 = vstv %s546
        %v548 = vmul.f32 %v544, %v547
        %v549 = vadd.f32 %v543, %v548
        %v550 = vld [vmem:[%s457] sm:$0x3]
        %s551 = sld [smem:[#allocation6 + $0x183]]
        %s552 = smul.f32 %s551, %s390
        %v553 = vstv %s552
        %v554 = vmul.f32 %v550, %v553
        %v555 = vadd.f32 %v549, %v554
        %v556 = vld [vmem:[#allocation2 + $0x3] sm:$0x1]
        %s558 = vtos %v556
        %v559 = vstv %s558
        %v561 = vadd.f32 %v555, %v559
        %s562 = scalar_lea.vmem %s371, 6
        %563 = vst [vmem:[%s562] sm:$0x3] %v561
        %p564 = scmp.lt.s32.totalorder %s25, 1
        %s565 = scalar_select %p564, %s25, 1
        %p566 = scmp.lt.s32.totalorder %s26, 0
        %s567 = scalar_select %p566, %s26, 0
        %s568 = smul.addr %s565, 4
        %s569 = sadd.s32 %s567, %s568
        %s570 = smul.addr %s569, 2
        %s571 = scalar_lea.vmem %s7, %s570
        // Predicated region
        $region61: #{cfg_denoiser_forward.1} parent=47 // pred_check
          %p572 = pneg %p217
        $region62: #{cfg_denoiser_forward.1} parent=47 // pred_check_branch
          %574 = sbr.rel (%p572) target = $region64
        $region63: #{cfg_denoiser_forward.1} parent=47 // pred_region
          _
        $region64: #{cfg_denoiser_forward.1} parent=47 // pred_fallthru
          _
      $region48: #{cfg_denoiser_forward.1} parent=5 // pred_fallthru
        _
      %p575 = scmp.le.s32.totalorder 2, %s16
      // Predicated region
      $region65: #{cfg_denoiser_forward.1} parent=5 // pred_check
        %p576 = pneg %p575
      $region66: #{cfg_denoiser_forward.1} parent=5 // pred_check_branch
        %578 = sbr.rel (%p576) target = $region68
      $region67: #{cfg_denoiser_forward.1} parent=5 // pred_region
        %s579 = ssub.s32 %s16, 2
        // Predicated region
        $region69: #{cfg_denoiser_forward.1} parent=67 // pred_check
          %p580 = pneg %p223
        $region70: #{cfg_denoiser_forward.1} parent=67 // pred_check_branch
          %582 = sbr.rel (%p580) target = $region72
        $region71: #{cfg_denoiser_forward.1} parent=67 // pred_region
          %p583 = scmp.lt.s32.totalorder %s27, 1
          %s584 = scalar_select %p583, %s27, 1
          %p585 = scmp.lt.s32.totalorder %s28, 0
          %s586 = scalar_select %p585, %s28, 0
          %s587 = smul.addr %s584, 4
          %s588 = sadd.s32 %s586, %s587
          %s589 = smul.addr %s588, 2
          %s590 = scalar_lea.vmem %s7, %s589
        $region72: #{cfg_denoiser_forward.1} parent=67 // pred_fallthru
          _
      $region68: #{cfg_denoiser_forward.1} parent=5 // pred_fallthru
        _
    $region6: #{cfg_denoiser_forward.1} parent=1 // loop_footer
      %s20 = sadd.s32 1, %s16
    $region7: #{cfg_denoiser_forward.1} parent=1 // loop_footer_branch
      %15 = sbr.rel target = $region3
    $region8: #{cfg_denoiser_forward.1} parent=1 // loop_exit
      _
    %591 = vsyncpa [#allocation5], 1
    %s592 = scalar_lea.sflag [#allocation5], 1
    %593 = vsyncpa %s592, 1
    %594 = vsyncpa [#allocation7], 1

</llo_original>
